<compile_context>
chip_gen: v5e
topology: v5e:2x2
jax: 0.10.0
libtpu: 0.0.40
codegen_flags: <defaults>
</compile_context>

<pallas_src>
import jax
import jax.numpy as jnp
from jax.experimental import pallas as pl
from jax.experimental.pallas import tpu as pltpu

# Deterministic "parameters" of the mix (the weights in *args).
W_MSE = 0.7
W_L1 = 0.3

LANES = 128


def mix_loss(x, y, *, w_mse=W_MSE, w_l1=W_L1, target_tile_bytes=4 << 20):
    """0.7 * MSE(x, y) + 0.3 * L1(x, y), both mean-reduced. Returns a scalar."""
    assert x.shape == y.shape, (x.shape, y.shape)
    n = x.size
    itemsize = jnp.dtype(x.dtype).itemsize
    # Sublane multiple for the input dtype: 8 (f32) / 16 (bf16) / 32 (int8/fp8).
    sub = max(8, 32 // max(itemsize, 1))

    rows = pl.cdiv(n, LANES)
    rows_padded = max(rows, sub)           # tiny-input guard only
    pad = rows_padded * LANES - n          # 0 whenever n % 128 == 0 (and not tiny)

    def _prep(a):
        flat = a.reshape(-1)
        if pad:
            # Only hit when n % 128 != 0 (or the whole input is < sub*128 elems):
            # < 1 lane-row of zeros.  Zeros contribute nothing to either sum;
            # the mean below divides by the true n.
            flat = jnp.pad(flat, (0, pad))
        return flat.reshape(rows_padded, LANES)   # native dtype, no upcast

    x2 = _prep(x)
    y2 = _prep(y)

    # Byte-sized row tile: ~target_tile_bytes of input per pipeline buffer
    # (8192 rows for f32), never exceeding the array itself.
    tm = max(sub, (target_tile_bytes // (LANES * itemsize)) // sub * sub)
    tm = min(tm, (rows_padded // sub) * sub)
    total_tiles = pl.cdiv(rows_padded, tm)

    # Leading axis: 2-way "parallel" so both v7x TensorCores stream; collapse to
    # 1 when there isn't enough work.
    num_slices = 2 if total_tiles >= 2 else 1
    steps = pl.cdiv(total_tiles, num_slices)

    ragged_rows = total_tiles * tm != rows_padded       # last tile overruns rows
    ragged_tiles = num_slices * steps != total_tiles    # last slice repeats a tile
    needs_mask = ragged_rows or ragged_tiles

    def in_index_map(p, i):
        t = p * steps + i
        if ragged_tiles:
            # Keep the DMA in bounds; the duplicated tile is masked to zero below.
            t = jnp.minimum(t, total_tiles - 1)
        return (t, 0)

    def kernel(x_ref, y_ref, sse_out_ref, sae_out_ref, sse_acc, sae_acc):
        p = pl.program_id(0)
        i = pl.program_id(1)

        @pl.when(i == 0)
        def _():
            sse_acc[...] = jnp.zeros_like(sse_acc)
            sae_acc[...] = jnp.zeros_like(sae_acc)

        d = x_ref[...].astype(jnp.float32) - y_ref[...].astype(jnp.float32)
        if needs_mask:
            # Ragged tail: rows at/after `rows_padded` hold unspecified values
            # (boundary-block DMA) or belong to a duplicated tile — zero them
            # before squaring/abs so NaN/Inf garbage never reaches the sums.
            row0 = (p * steps + i) * tm
            row_ids = row0 + jax.lax.broadcasted_iota(jnp.int32, (tm, LANES), 0)
            d = jnp.where(row_ids < rows_padded, d, 0.0)
        sq = d * d
        ab = jnp.abs(d)
        # Fold the tile down to one vreg-shaped (8,128) partial per quantity
        # (pure VPU adds); cross-sublane/lane reduction deferred to the epilogue.
        sse_acc[...] += sq.reshape(tm // 8, 8, LANES).sum(axis=0)
        sae_acc[...] += ab.reshape(tm // 8, 8, LANES).sum(axis=0)

        @pl.when(i == pl.num_programs(1) - 1)
        def _():
            # vreg-aligned (1,8,128) blocks -> unmasked, aligned stores.
            sse_out_ref[...] = sse_acc[...].reshape(1, 8, LANES)
            sae_out_ref[...] = sae_acc[...].reshape(1, 8, LANES)

    tile_bytes = tm * LANES * itemsize
    # 2 inputs x 2 pipeline buffers per tile plus headroom; clears v5e's 16 MiB
    # default scoped-VMEM limit, stays well under v7x's 64 MiB/TC.
    vmem_limit = int(min(48 << 20, max(16 << 20, 4 * tile_bytes + (8 << 20))))

    cost = pl.CostEstimate(
        flops=7 * n,
        transcendentals=0,
        bytes_accessed=2 * rows_padded * LANES * itemsize
        + 2 * num_slices * 8 * LANES * 4,
    )

    sse_out, sae_out = pl.pallas_call(
        kernel,
        out_shape=(
            jax.ShapeDtypeStruct((num_slices, 8, LANES), jnp.float32),
            jax.ShapeDtypeStruct((num_slices, 8, LANES), jnp.float32),
        ),
        grid_spec=pltpu.PrefetchScalarGridSpec(
            num_scalar_prefetch=0,
            grid=(num_slices, steps),
            in_specs=[
                pl.BlockSpec((tm, LANES), in_index_map),
                pl.BlockSpec((tm, LANES), in_index_map),
            ],
            out_specs=[
                pl.BlockSpec((1, 8, LANES), lambda p, i: (p, 0, 0)),
                pl.BlockSpec((1, 8, LANES), lambda p, i: (p, 0, 0)),
            ],
            scratch_shapes=[
                pltpu.VMEM((8, LANES), jnp.float32),
                pltpu.VMEM((8, LANES), jnp.float32),
            ],
        ),
        compiler_params=pltpu.CompilerParams(
            dimension_semantics=("parallel", "arbitrary"),
            vmem_limit_bytes=vmem_limit,
        ),
        cost_estimate=cost,
    )(x2, y2)

    # Tiny epilogue: cross-sublane/lane/slice reduce + the 0.7/0.3 mix, using
    # the true element count n for both means.
    sse = jnp.sum(sse_out)
    sae = jnp.sum(sae_out)
    return (jnp.float32(w_mse) * sse + jnp.float32(w_l1) * sae) / jnp.float32(n)


if __name__ == "__main__":
    key = jax.random.PRNGKey(0)
    kx, ky = jax.random.split(key)

    # 1) Canonical NCHW shape [B=2, C=4, H=16, W=16] — lane-aligned path
    #    (no padding, no extra HBM pass).
    x = jax.random.normal(kx, (2, 4, 16, 16), dtype=jnp.float32)
    y = jax.random.normal(ky, (2, 4, 16, 16), dtype=jnp.float32)
    out = jax.block_until_ready(mix_loss(x, y))
    ref = W_MSE * jnp.mean((x - y) ** 2) + W_L1 * jnp.mean(jnp.abs(x - y))
    assert jnp.allclose(out, ref, rtol=1e-5, atol=1e-6), (out, ref)

    # 2) Ragged shape (n % 128 != 0) — exercises the in-kernel tail mask,
    #    the boundary (partial) block and the 2-slice grid.
    kx2, ky2 = jax.random.split(jax.random.PRNGKey(1))
    xr = jax.random.normal(kx2, (2, 3, 15, 15), dtype=jnp.float32)
    yr = jax.random.normal(ky2, (2, 3, 15, 15), dtype=jnp.float32)
    out_r = jax.block_until_ready(mix_loss(xr, yr))
    ref_r = W_MSE * jnp.mean((xr - yr) ** 2) + W_L1 * jnp.mean(jnp.abs(xr - yr))
    assert jnp.allclose(out_r, ref_r, rtol=1e-5, atol=1e-6), (out_r, ref_r)

    print("KERNEL_OK")
</pallas_src>

<mosaic_0001>
module attributes {stable_mosaic.version = 11 : i64} {
  func.func @kernel(%arg0: i32, %arg1: i32, %arg2: memref<16x128xf32, #tpu.memory_space<vmem>>, %arg3: memref<16x128xf32, #tpu.memory_space<vmem>>, %arg4: memref<1x8x128xf32, #tpu.memory_space<vmem>>, %arg5: memref<1x8x128xf32, #tpu.memory_space<vmem>>, %arg6: memref<8x128xf32, #tpu.memory_space<vmem>>, %arg7: memref<8x128xf32, #tpu.memory_space<vmem>>) attributes {dimension_semantics = [#tpu.dimension_semantics<parallel>, #tpu.dimension_semantics<arbitrary>], iteration_bounds = array<i64: 1, 1>, scalar_prefetch = 0 : i64, scratch_operands = 2 : i64, tpu.core_type = #tpu.core_type<tc>, window_params = [{transform_indices = @transform_0, window_bounds = array<i64: 16, 128>}, {transform_indices = @transform_1, window_bounds = array<i64: 16, 128>}, {transform_indices = @transform_2, window_bounds = array<i64: 1, 8, 128>}, {transform_indices = @transform_3, window_bounds = array<i64: 1, 8, 128>}]} {
    %c0_i32 = arith.constant 0 : i32
    %0 = arith.cmpi eq, %arg1, %c0_i32 : i32
    %1 = arith.extui %0 : i1 to i32
    %c0_i32_0 = arith.constant 0 : i32
    %2 = arith.cmpi ne, %1, %c0_i32_0 : i32
    scf.if %2 {
      %cst_15 = arith.constant 0.000000e+00 : f32
      %21 = vector.broadcast %cst_15 : f32 to vector<8x128xf32>
      %c0_16 = arith.constant 0 : index
      %c0_17 = arith.constant 0 : index
      %22 = vector.load %arg6[%c0_16, %c0_17] : memref<8x128xf32, #tpu.memory_space<vmem>>, vector<8x128xf32>
      tpu.vector_store %arg6[%c0_16, %c0_17], %21 {strides = array<i32>} : memref<8x128xf32, #tpu.memory_space<vmem>>, vector<8x128xf32>,
      %cst_18 = arith.constant 0.000000e+00 : f32
      %23 = vector.broadcast %cst_18 : f32 to vector<8x128xf32>
      %c0_19 = arith.constant 0 : index
      %c0_20 = arith.constant 0 : index
      %24 = vector.load %arg7[%c0_19, %c0_20] : memref<8x128xf32, #tpu.memory_space<vmem>>, vector<8x128xf32>
      tpu.vector_store %arg7[%c0_19, %c0_20], %23 {strides = array<i32>} : memref<8x128xf32, #tpu.memory_space<vmem>>, vector<8x128xf32>,
    } else {
    }
    %c0 = arith.constant 0 : index
    %c0_1 = arith.constant 0 : index
    %3 = vector.load %arg2[%c0, %c0_1] : memref<16x128xf32, #tpu.memory_space<vmem>>, vector<16x128xf32>
    %c0_2 = arith.constant 0 : index
    %c0_3 = arith.constant 0 : index
    %4 = vector.load %arg3[%c0_2, %c0_3] : memref<16x128xf32, #tpu.memory_space<vmem>>, vector<16x128xf32>
    %5 = arith.subf %3, %4 : vector<16x128xf32>
    %6 = arith.mulf %5, %5 : vector<16x128xf32>
    %7 = math.absf %5 : vector<16x128xf32>
    %c0_4 = arith.constant 0 : index
    %c0_5 = arith.constant 0 : index
    %8 = vector.load %arg6[%c0_4, %c0_5] : memref<8x128xf32, #tpu.memory_space<vmem>>, vector<8x128xf32>
    %9 = vector.shape_cast %6 : vector<16x128xf32> to vector<2x8x128xf32>
    %cst = arith.constant dense<0.000000e+00> : vector<8x128xf32>
    %10 = vector.multi_reduction <add>, %9, %cst [0] : vector<2x8x128xf32> to vector<8x128xf32>
    %11 = arith.addf %8, %10 : vector<8x128xf32>
    %c0_6 = arith.constant 0 : index
    %c0_7 = arith.constant 0 : index
    %12 = vector.load %arg6[%c0_6, %c0_7] : memref<8x128xf32, #tpu.memory_space<vmem>>, vector<8x128xf32>
    tpu.vector_store %arg6[%c0_6, %c0_7], %11 {strides = array<i32>} : memref<8x128xf32, #tpu.memory_space<vmem>>, vector<8x128xf32>,
    %c0_8 = arith.constant 0 : index
    %c0_9 = arith.constant 0 : index
    %13 = vector.load %arg7[%c0_8, %c0_9] : memref<8x128xf32, #tpu.memory_space<vmem>>, vector<8x128xf32>
    %14 = vector.shape_cast %7 : vector<16x128xf32> to vector<2x8x128xf32>
    %cst_10 = arith.constant dense<0.000000e+00> : vector<8x128xf32>
    %15 = vector.multi_reduction <add>, %14, %cst_10 [0] : vector<2x8x128xf32> to vector<8x128xf32>
    %16 = arith.addf %13, %15 : vector<8x128xf32>
    %c0_11 = arith.constant 0 : index
    %c0_12 = arith.constant 0 : index
    %17 = vector.load %arg7[%c0_11, %c0_12] : memref<8x128xf32, #tpu.memory_space<vmem>>, vector<8x128xf32>
    tpu.vector_store %arg7[%c0_11, %c0_12], %16 {strides = array<i32>} : memref<8x128xf32, #tpu.memory_space<vmem>>, vector<8x128xf32>,
    %c0_i32_13 = arith.constant 0 : i32
    %18 = arith.cmpi eq, %arg1, %c0_i32_13 : i32
    %19 = arith.extui %18 : i1 to i32
    %c0_i32_14 = arith.constant 0 : i32
    %20 = arith.cmpi ne, %19, %c0_i32_14 : i32
    scf.if %20 {
      %c0_15 = arith.constant 0 : index
      %c0_16 = arith.constant 0 : index
      %21 = vector.load %arg6[%c0_15, %c0_16] : memref<8x128xf32, #tpu.memory_space<vmem>>, vector<8x128xf32>
      %22 = vector.shape_cast %21 : vector<8x128xf32> to vector<1x8x128xf32>
      %c0_17 = arith.constant 0 : index
      %c0_18 = arith.constant 0 : index
      %c0_19 = arith.constant 0 : index
      %23 = vector.load %arg4[%c0_17, %c0_18, %c0_19] : memref<1x8x128xf32, #tpu.memory_space<vmem>>, vector<1x8x128xf32>
      tpu.vector_store %arg4[%c0_17, %c0_18, %c0_19], %22 {strides = array<i32>} : memref<1x8x128xf32, #tpu.memory_space<vmem>>, vector<1x8x128xf32>,
      %c0_20 = arith.constant 0 : index
      %c0_21 = arith.constant 0 : index
      %24 = vector.load %arg7[%c0_20, %c0_21] : memref<8x128xf32, #tpu.memory_space<vmem>>, vector<8x128xf32>
      %25 = vector.shape_cast %24 : vector<8x128xf32> to vector<1x8x128xf32>
      %c0_22 = arith.constant 0 : index
      %c0_23 = arith.constant 0 : index
      %c0_24 = arith.constant 0 : index
      %26 = vector.load %arg5[%c0_22, %c0_23, %c0_24] : memref<1x8x128xf32, #tpu.memory_space<vmem>>, vector<1x8x128xf32>
      tpu.vector_store %arg5[%c0_22, %c0_23, %c0_24], %25 {strides = array<i32>} : memref<1x8x128xf32, #tpu.memory_space<vmem>>, vector<1x8x128xf32>,
    } else {
    }
    return
  }
  func.func @transform_0(%arg0: i32, %arg1: i32) -> (i32, i32) {
    %c1_i32 = arith.constant 1 : i32
    %0 = arith.muli %arg0, %c1_i32 : i32
    %1 = arith.addi %0, %arg1 : i32
    %c0_i32 = arith.constant 0 : i32
    %c0_i32_0 = arith.constant 0 : i32
    return %1, %c0_i32 : i32, i32
  }
  func.func @transform_1(%arg0: i32, %arg1: i32) -> (i32, i32) {
    %c1_i32 = arith.constant 1 : i32
    %0 = arith.muli %arg0, %c1_i32 : i32
    %1 = arith.addi %0, %arg1 : i32
    %c0_i32 = arith.constant 0 : i32
    %c0_i32_0 = arith.constant 0 : i32
    return %1, %c0_i32 : i32, i32
  }
  func.func @transform_2(%arg0: i32, %arg1: i32) -> (i32, i32, i32) {
    %c0_i32 = arith.constant 0 : i32
    %c0_i32_0 = arith.constant 0 : i32
    %c0_i32_1 = arith.constant 0 : i32
    return %arg0, %c0_i32, %c0_i32_0 : i32, i32, i32
  }
  func.func @transform_3(%arg0: i32, %arg1: i32) -> (i32, i32, i32) {
    %c0_i32 = arith.constant 0 : i32
    %c0_i32_0 = arith.constant 0 : i32
    %c0_i32_1 = arith.constant 0 : i32
    return %arg0, %c0_i32, %c0_i32_0 : i32, i32, i32
  }
}

</mosaic_0001>

<llo_original>
// kernel: tpu_custom_call.1
$region0: #{tpu_custom_call.1}
  #allocation0 [shape = 'u32[]', space=smem, size = 0x4, offset = 0x4, fixed_abs, tag = 'smem constant byte address 0x4 - core index']
  #allocation1 [shape = 'u32[72,128]{1,0:T(1,128)}', space=vmem, size = 0x9000, scoped, tag = 'internal scratch']
  #allocation2 [shape = 'f32[8,128]{1,0:T(8,128)}', space=vmem, size = 0x1000, scoped, tag = 'scratch operand']
  #allocation3 [shape = 'f32[8,128]{1,0:T(8,128)}', space=vmem, size = 0x1000, scoped, tag = 'scratch operand']
  %s0 = inlined_call_operand.hbm [shape: f32[16,128], index: 0, kind: input, shape index: {}]
  %s1 = inlined_call_operand.hbm [shape: f32[16,128], index: 1, kind: input, shape index: {}]
  %s2 = inlined_call_operand.hbm [shape: f32[1,8,128], index: 2, kind: output, shape index: {0}]
  %s3 = inlined_call_operand.hbm [shape: f32[1,8,128], index: 3, kind: output, shape index: {1}]
  %4 = xla_tuple %s2, %s3
  %s5 = sld [smem:[#allocation0]]
  $region42: #{tpu_custom_call.1} parent=0
    _
  %s7 = ssub.s32 1, %s5
  %s8 = scalar_select 0, %s7, %s5
  $region1: #{tpu_custom_call.1} parent=0
    #allocation4 [shape = 'u8[8192]{0}', space=vmem, size = 0x2000, scoped, tag = 'input window, operand 0, single buffered']
    #allocation5 [shape = 's32[1]{0}', space=sflag, size = 0x4, scoped, tag = 'scoped memory for tpu_custom_call.1']
    #allocation6 [shape = 's32[1]{0}', space=sflag, size = 0x4, scoped, tag = 'scoped memory for tpu_custom_call.1']
    #allocation7 [shape = 'u8[8192]{0}', space=vmem, size = 0x2000, scoped, tag = 'input window, operand 1, single buffered']
    #allocation8 [shape = 's32[1]{0}', space=sflag, size = 0x4, scoped, tag = 'scoped memory for tpu_custom_call.1']
    #allocation9 [shape = 'u8[4096]{0}', space=vmem, size = 0x1000, scoped, tag = 'output window, operand 0, single buffered']
    #allocation10 [shape = 'u8[4096]{0}', space=vmem, size = 0x1000, scoped, tag = 'output window, operand 1, single buffered']
    #allocation11 [shape = 's32[1]{0}', space=sflag, size = 0x4, scoped, tag = 'scoped memory for tpu_custom_call.1']
    %9 = vsyncpa [#allocation5], 0
    %10 = vsyncpa [#allocation8], 0
    %11 = vsyncpa [#allocation6], 0
    %12 = vsyncpa [#allocation11], 0
    // Predicated region
    $region2: #{tpu_custom_call.1} parent=1 // pred_check
      _
    $region3: #{tpu_custom_call.1} parent=1 // pred_check_branch
      %14 = sbr.rel (0) target = $region5
    $region4: #{tpu_custom_call.1} parent=1 // pred_region
      %s15 = sadd.s32 0, 0
      %s16 = smul.u32 2, %s15
      %18 = vsyncadd [#allocation5], 0
      %s19 = smul.addr %s16, 8
      %s20 = scalar_lea.hbm %s0, %s19
      %s21 = sshll.u32 %s20, 4
      %s22 = int_to_ptr.hbm [resolvable:$true] %s21
      %s23 = sshll.u32 [#allocation4], 4
      %s24 = int_to_ptr.vmem [resolvable:$true] %s23
      %29 = dma.hbm_to_vmem [thread:$0]  %s22, 256, %s24, [#allocation5], 128, 128, 8
    $region5: #{tpu_custom_call.1} parent=1 // pred_fallthru
      _
    // Predicated region
    $region6: #{tpu_custom_call.1} parent=1 // pred_check
      _
    $region7: #{tpu_custom_call.1} parent=1 // pred_check_branch
      %31 = sbr.rel (0) target = $region9
    $region8: #{tpu_custom_call.1} parent=1 // pred_region
      %s32 = sadd.s32 0, 0
      %s33 = smul.u32 2, %s32
      %35 = vsyncadd [#allocation8], 0
      %s36 = smul.addr %s33, 8
      %s37 = scalar_lea.hbm %s1, %s36
      %s38 = sshll.u32 %s37, 4
      %s39 = int_to_ptr.hbm [resolvable:$true] %s38
      %s40 = sshll.u32 [#allocation7], 4
      %s41 = int_to_ptr.vmem [resolvable:$true] %s40
      %46 = dma.hbm_to_vmem [thread:$0]  %s39, 256, %s41, [#allocation8], 128, 128, 8
    $region9: #{tpu_custom_call.1} parent=1 // pred_fallthru
      _
    // Predicated region
    $region10: #{tpu_custom_call.1} parent=1 // pred_check
      _
    $region11: #{tpu_custom_call.1} parent=1 // pred_check_branch
      %48 = sbr.rel (0) target = $region13
    $region12: #{tpu_custom_call.1} parent=1 // pred_region
      %50 = dma.done [#allocation5], 256
    $region13: #{tpu_custom_call.1} parent=1 // pred_fallthru
      _
    // Predicated region
    $region14: #{tpu_custom_call.1} parent=1 // pred_check
      _
    $region15: #{tpu_custom_call.1} parent=1 // pred_check_branch
      %52 = sbr.rel (0) target = $region17
    $region16: #{tpu_custom_call.1} parent=1 // pred_region
      %54 = dma.done [#allocation8], 256
    $region17: #{tpu_custom_call.1} parent=1 // pred_fallthru
      _
    %s55 = sadd.s32 0, 0
    %s56 = smul.u32 2, %s55
    %s57 = sadd.s32 0, 0
    %s58 = smul.u32 2, %s57
    %p59 = scmp.eq.s32.totalorder 0, 0
    // Predicated region
    $region18: #{tpu_custom_call.1} parent=1 // pred_check
      %p60 = pneg %p59
    $region19: #{tpu_custom_call.1} parent=1 // pred_check_branch
      %62 = sbr.rel (%p60) target = $region21
    $region20: #{tpu_custom_call.1} parent=1 // pred_region
      %63 = vst [vmem:[#allocation2] sm:$0xff] 0.0
      %64 = vst [vmem:[#allocation3] sm:$0xff] 0.0
    $region21: #{tpu_custom_call.1} parent=1 // pred_fallthru
      _
    %v65 = vld [vmem:[#allocation4] sm:$0xff]
    %v66 = vld [vmem:[#allocation4 + $0x8] sm:$0xff]
    %v67 = vld [vmem:[#allocation7] sm:$0xff]
    %v68 = vld [vmem:[#allocation7 + $0x8] sm:$0xff]
    %v69 = vsub.f32 %v65, %v67
    %v70 = vsub.f32 %v66, %v68
    %v71 = vmul.f32 %v69, %v69
    %v72 = vmul.f32 %v70, %v70
    %v73 = vand.u32 2147483647, %v69
    %v74 = vand.u32 2147483647, %v70
    %v75 = vld [vmem:[#allocation2] sm:$0xff]
    %v76 = vadd.f32 %v71, %v72
    %v77 = vadd.f32 %v75, %v76
    %78 = vst [vmem:[#allocation2] sm:$0xff] %v77
    %v79 = vld [vmem:[#allocation3] sm:$0xff]
    %v80 = vadd.f32 %v73, %v74
    %v81 = vadd.f32 %v79, %v80
    %82 = vst [vmem:[#allocation3] sm:$0xff] %v81
    // Predicated region
    $region22: #{tpu_custom_call.1} parent=1 // pred_check
      %p83 = pneg %p59
    $region23: #{tpu_custom_call.1} parent=1 // pred_check_branch
      %85 = sbr.rel (%p83) target = $region25
    $region24: #{tpu_custom_call.1} parent=1 // pred_region
      %v86 = vld [vmem:[#allocation2] sm:$0xff]
      %87 = vst [vmem:[#allocation9] sm:$0xff] %v86
      %v88 = vld [vmem:[#allocation3] sm:$0xff]
      %89 = vst [vmem:[#allocation10] sm:$0xff] %v88
    $region25: #{tpu_custom_call.1} parent=1 // pred_fallthru
      _
    // Predicated region
    $region26: #{tpu_custom_call.1} parent=1 // pred_check
      _
    $region27: #{tpu_custom_call.1} parent=1 // pred_check_branch
      %91 = sbr.rel (0) target = $region29
    $region28: #{tpu_custom_call.1} parent=1 // pred_region
      %93 = vsyncadd [#allocation6], 0
      %s95 = sshll.u32 [#allocation9], 4
      %s96 = int_to_ptr.vmem [resolvable:$true] %s95
      %s97 = sshll.u32 %s2, 4
      %s98 = int_to_ptr.hbm [resolvable:$true] %s97
      %100 = dma.vmem_to_hbm [thread:$0]  %s96, 128, %s98, [#allocation6]
    $region29: #{tpu_custom_call.1} parent=1 // pred_fallthru
      _
    // Predicated region
    $region30: #{tpu_custom_call.1} parent=1 // pred_check
      _
    $region31: #{tpu_custom_call.1} parent=1 // pred_check_branch
      %102 = sbr.rel (0) target = $region33
    $region32: #{tpu_custom_call.1} parent=1 // pred_region
      %104 = vsyncadd [#allocation11], 0
      %s106 = sshll.u32 [#allocation10], 4
      %s107 = int_to_ptr.vmem [resolvable:$true] %s106
      %s108 = sshll.u32 %s3, 4
      %s109 = int_to_ptr.hbm [resolvable:$true] %s108
      %111 = dma.vmem_to_hbm [thread:$0]  %s107, 128, %s109, [#allocation11]
    $region33: #{tpu_custom_call.1} parent=1 // pred_fallthru
      _
    // Predicated region
    $region34: #{tpu_custom_call.1} parent=1 // pred_check
      _
    $region35: #{tpu_custom_call.1} parent=1 // pred_check_branch
      %113 = sbr.rel (0) target = $region37
    $region36: #{tpu_custom_call.1} parent=1 // pred_region
      %115 = dma.done [#allocation6], 128
    $region37: #{tpu_custom_call.1} parent=1 // pred_fallthru
      _
    // Predicated region
    $region38: #{tpu_custom_call.1} parent=1 // pred_check
      _
    $region39: #{tpu_custom_call.1} parent=1 // pred_check_branch
      %117 = sbr.rel (0) target = $region41
    $region40: #{tpu_custom_call.1} parent=1 // pred_region
      %119 = dma.done [#allocation11], 128
    $region41: #{tpu_custom_call.1} parent=1 // pred_fallthru
      _
    %120 = vsyncpa [#allocation5], 1
    %121 = vsyncpa [#allocation8], 1
    %122 = vsyncpa [#allocation6], 1
    %123 = vsyncpa [#allocation11], 1

</llo_original>
